<compile_context>
chip_gen: v7x
topology: tpu7x:2x2x1
jax: 0.10.0
libtpu: 0.0.40
codegen_flags: <defaults>
</compile_context>

<pallas_src>
import jax
import jax.numpy as jnp
from jax.experimental import pallas as pl
from jax.experimental.pallas import tpu as pltpu

LANE = 128                    # lane width: channel dim padded to multiples
SUB = 8                       # sublane granule (f32)
TM_MAX = 512                  # im2col rows per grid step
TK = 256                      # contraction tile for the huge-K fallback
FULLK_VMEM_BUDGET = 24 << 20  # keep kernel-1 footprint comfortably scoped


def _round_up(a, b):
    return (a + b - 1) // b * b


def _compiler_params(dims, est_vmem_bytes):
    # Raise the scoped-VMEM limit only when the estimate needs it (v5e default
    # is 16 MiB); cap with headroom. TODO(synk): re-derive cap for v7x (64 MiB).
    limit = None
    if est_vmem_bytes > (14 << 20):
        limit = min(est_vmem_bytes + (8 << 20), 96 << 20)
    return pltpu.CompilerParams(dimension_semantics=dims, vmem_limit_bytes=limit)


def _conv_stats_kernel(x_ref, w_ref, y_ref, psum_ref, pssq_ref):
    """Full-K im2col matmul + per-tile channel stats (common path).

    The weight is one (Kp, Cp) VMEM-resident block (constant index map ->
    DMA'd once), so there is no K grid axis and no accumulator scratch: the
    f32 MXU result goes straight to the bf16 y block, and per-channel partial
    sums/sumsqs are reduced with pure VPU vreg adds (no XLU) into lane-dense
    (8, Cp) blocks; the tiny cross-tile reduction happens in host JAX, which
    keeps the M axis 'parallel' (2 TensorCores on v7x).
    """
    y = jnp.dot(x_ref[...], w_ref[...], preferred_element_type=jnp.float32)
    y_ref[...] = y.astype(y_ref.dtype)
    tm, cp = y.shape
    y3 = y.reshape(tm // SUB, SUB, cp)      # vreg-granular reshape (free)
    psum_ref[...] = jnp.sum(y3, axis=0)     # VPU adds across vregs
    pssq_ref[...] = jnp.sum(y3 * y3, axis=0)


def _conv_stats_kernel_kgrid(x_ref, w_ref, y_ref, psum_ref, pssq_ref):
    """Fallback for huge K (weight cannot live in VMEM): K grid axis,
    accumulating directly into the K-resident f32 y block (no VMEM scratch),
    stats emitted on the last K step.  Correct only while K is the innermost
    'arbitrary' grid axis (y/psum/pssq block indices are k-invariant)."""
    k = pl.program_id(1)

    @pl.when(k == 0)
    def _():
        y_ref[...] = jnp.zeros_like(y_ref)

    y_ref[...] += jnp.dot(x_ref[...], w_ref[...],
                          preferred_element_type=jnp.float32)

    @pl.when(k == pl.num_programs(1) - 1)
    def _():
        y = y_ref[...]
        tm, cp = y.shape
        y3 = y.reshape(tm // SUB, SUB, cp)
        psum_ref[...] = jnp.sum(y3, axis=0)
        pssq_ref[...] = jnp.sum(y3 * y3, axis=0)


def _bn_relu_kernel(y_ref, scale_ref, shift_ref, o_ref):
    """Fused folded-BatchNorm affine + ReLU.  Math in f32 (v5e has no bf16
    VALU); input may be the bf16 conv slab."""
    y = y_ref[...].astype(jnp.float32)
    o_ref[...] = jnp.maximum(y * scale_ref[...] + shift_ref[...], 0.0)


def conv_block_forward(x, weight, gamma, beta, *, stride=1, padding=0, eps=1e-5):
    """ReLU(BatchNorm2d(Conv2d(x, weight, bias=None))) with batch statistics.

    x: (N, Cin, H, W) f32, weight: (Cout, Cin, kh, kw) f32.
    Returns (N, Cout, Ho, Wo) f32 (NCHW, PyTorch layout).
    """
    N, Cin, H, W = x.shape
    Cout, _, kh, kw = weight.shape
    if padding:
        x = jnp.pad(x, ((0, 0), (0, 0), (padding, padding), (padding, padding)))
        H += 2 * padding
        W += 2 * padding
    Ho = (H - kh) // stride + 1
    Wo = (W - kw) // stride + 1

    # bf16 operands feed the MXU at native rate (f32 matmul is multi-pass) and
    # halve HBM traffic of the im2col stream; accumulation stays f32 in-kernel.
    xb = x.astype(jnp.bfloat16)
    wb = weight.astype(jnp.bfloat16)

    # ---- im2col (host glue, bf16) --------------------------------------------
    # TODO(synk): replace host-side im2col (kh*kw HBM blowup, worst on v5e) with
    # an in-kernel direct conv over NHWC (per-tap shifted matmuls with halo'd
    # BlockSpecs).
    patches = []
    for i in range(kh):
        for j in range(kw):
            patches.append(xb[:, :, i:i + Ho * stride:stride, j:j + Wo * stride:stride])
    xp = jnp.stack(patches, axis=2)                        # (N, Cin, kh*kw, Ho, Wo)
    xcol = xp.transpose(0, 3, 4, 1, 2).reshape(N * Ho * Wo, Cin * kh * kw)
    wmat = wb.reshape(Cout, Cin * kh * kw).T               # (K, Cout)

    M, K = xcol.shape
    Cp = _round_up(Cout, LANE)          # lane-dense (unmasked) output stores

    # M tiling: big tiles amortize the ~0.35us/step overhead, but keep >= 2
    # tiles so the 'parallel' M axis feeds both v7x TensorCores; multiple of 16
    # keeps bf16 sublane packing clean.
    TM = min(TM_MAX, _round_up(max(SUB, -(-M // 2)), 16))
    Mp = _round_up(M, TM)
    gm = Mp // TM

    # Shallow K (typical conv: Cin*kh*kw): pad K only to the bf16 sublane
    # granule, keep the whole weight VMEM-resident, no K grid axis.
    Kp_full = _round_up(K, 16)
    fullk_vmem = 2 * (TM * Kp_full + Kp_full * Cp + TM * Cp) * 2 + 8 * SUB * Cp * 4
    use_fullk = fullk_vmem <= FULLK_VMEM_BUDGET

    if use_fullk:
        Kp = Kp_full
        xcol_p = jnp.pad(xcol, ((0, Mp - M), (0, Kp - K)))   # zero pads are inert
        wmat_p = jnp.pad(wmat, ((0, Kp - K), (0, Cp - Cout)))
        y_p, psum, pssq = pl.pallas_call(
            _conv_stats_kernel,
            out_shape=(jax.ShapeDtypeStruct((Mp, Cp), jnp.bfloat16),
                       jax.ShapeDtypeStruct((gm * SUB, Cp), jnp.float32),
                       jax.ShapeDtypeStruct((gm * SUB, Cp), jnp.float32)),
            grid_spec=pltpu.PrefetchScalarGridSpec(
                num_scalar_prefetch=0,
                grid=(gm,),
                in_specs=[pl.BlockSpec((TM, Kp), lambda i: (i, 0)),
                          # constant index map -> weight DMA'd once, VMEM-resident
                          pl.BlockSpec((Kp, Cp), lambda i: (0, 0))],
                out_specs=[pl.BlockSpec((TM, Cp), lambda i: (i, 0)),
                           pl.BlockSpec((SUB, Cp), lambda i: (i, 0)),
                           pl.BlockSpec((SUB, Cp), lambda i: (i, 0))]),
            compiler_params=_compiler_params(("parallel",), fullk_vmem),
        )(xcol_p, wmat_p)
    else:
        # Huge-K fallback: chunk K (TK=256 halves K-step count vs 128).  The
        # weight block cycles with k (re-fetched per M tile) — acceptable only
        # because it cannot be VMEM-resident at these sizes.
        Kp = _round_up(K, TK)
        gk = Kp // TK
        xcol_p = jnp.pad(xcol, ((0, Mp - M), (0, Kp - K)))
        wmat_p = jnp.pad(wmat, ((0, Kp - K), (0, Cp - Cout)))
        est = 2 * (TM * TK * 2 + TK * Cp * 2 + TM * Cp * 4) + 8 * SUB * Cp * 4
        y_p, psum, pssq = pl.pallas_call(
            _conv_stats_kernel_kgrid,
            out_shape=(jax.ShapeDtypeStruct((Mp, Cp), jnp.float32),
                       jax.ShapeDtypeStruct((gm * SUB, Cp), jnp.float32),
                       jax.ShapeDtypeStruct((gm * SUB, Cp), jnp.float32)),
            grid_spec=pltpu.PrefetchScalarGridSpec(
                num_scalar_prefetch=0,
                grid=(gm, gk),
                in_specs=[pl.BlockSpec((TM, TK), lambda i, k: (i, k)),
                          pl.BlockSpec((TK, Cp), lambda i, k: (k, 0))],
                out_specs=[pl.BlockSpec((TM, Cp), lambda i, k: (i, 0)),
                           pl.BlockSpec((SUB, Cp), lambda i, k: (i, 0)),
                           pl.BlockSpec((SUB, Cp), lambda i, k: (i, 0))]),
            compiler_params=_compiler_params(("parallel", "arbitrary"), est),
        )(xcol_p, wmat_p)

    # ---- BatchNorm folding (train-mode batch statistics, biased variance) ----
    # Tiny host reduction over (gm*8, Cp) partials; padded rows contributed 0
    # and the divide uses the true M, so stats are exact w.r.t. the f32 conv.
    tot_sum = jnp.sum(psum, axis=0)[:Cout]
    tot_ssq = jnp.sum(pssq, axis=0)[:Cout]
    mean = tot_sum / M
    # NOTE: E[y^2]-E[y]^2 is cancellation-prone at extreme magnitudes; clamped.
    # TODO(synk): switch to a shifted-mean / Welford reduction for production.
    var = jnp.maximum(tot_ssq / M - mean * mean, 0.0)
    scale = gamma / jnp.sqrt(var + eps)
    shift = beta - mean * scale
    scale_p = jnp.pad(scale, (0, Cp - Cout)).reshape(1, Cp)  # padded chans -> 0
    shift_p = jnp.pad(shift, (0, Cp - Cout)).reshape(1, Cp)

    # ---- Pallas kernel 2: fused BN affine + ReLU ------------------------------
    # y_p is bf16 in the common path (half the read bytes of this mem-bound
    # pass); output is f32 to preserve module semantics, which is also why
    # input_output_aliases is not used here (dtypes differ).
    k2_vmem = 2 * TM * Cp * (jnp.dtype(y_p.dtype).itemsize + 4) + 4 * Cp * 4
    out_p = pl.pallas_call(
        _bn_relu_kernel,
        out_shape=jax.ShapeDtypeStruct((Mp, Cp), jnp.float32),
        grid_spec=pltpu.PrefetchScalarGridSpec(
            num_scalar_prefetch=0,
            grid=(gm,),
            in_specs=[pl.BlockSpec((TM, Cp), lambda i: (i, 0)),
                      pl.BlockSpec((1, Cp), lambda i: (0, 0)),
                      pl.BlockSpec((1, Cp), lambda i: (0, 0))],
            out_specs=pl.BlockSpec((TM, Cp), lambda i: (i, 0))),
        compiler_params=_compiler_params(("parallel",), k2_vmem),
    )(y_p, scale_p, shift_p)

    # TODO(synk): skip this NHWC->NCHW transpose (one extra HBM pass) when the
    # consumer accepts NHWC; kept so the returned layout matches PyTorch.
    out = out_p[:M, :Cout].reshape(N, Ho, Wo, Cout).transpose(0, 3, 1, 2)
    return out


if __name__ == "__main__":
    key = jax.random.PRNGKey(0)
    kx, kw = jax.random.split(key)

    N, Cin, H, W = 2, 4, 16, 16
    Cout, ksz = 8, 3

    x = jax.random.normal(kx, (N, Cin, H, W), dtype=jnp.float32)
    weight = 0.1 * jax.random.normal(kw, (Cout, Cin, ksz, ksz), dtype=jnp.float32)
    gamma = jnp.ones((Cout,), jnp.float32)   # nn.BatchNorm2d default affine init
    beta = jnp.zeros((Cout,), jnp.float32)

    out = conv_block_forward(x, weight, gamma, beta)
    out = jax.block_until_ready(out)

    # Sanity check against a plain-JAX reference that uses the same bf16 input
    # quantization the kernel intentionally applies (remaining deltas: bf16
    # rounding of the intermediate conv slab + summation-order differences).
    xq = x.astype(jnp.bfloat16).astype(jnp.float32)
    wq = weight.astype(jnp.bfloat16).astype(jnp.float32)
    ref_conv = jax.lax.conv_general_dilated(
        xq, wq, (1, 1), 'VALID', dimension_numbers=('NCHW', 'OIHW', 'NCHW'))
    m = ref_conv.mean(axis=(0, 2, 3))
    v = ref_conv.var(axis=(0, 2, 3))
    ref = jnp.maximum(
        (ref_conv - m[None, :, None, None]) / jnp.sqrt(v[None, :, None, None] + 1e-5),
        0.0)

    assert out.shape == (N, Cout, H - ksz + 1, W - ksz + 1)
    err = float(jnp.max(jnp.abs(out - ref)))
    assert err < 2.5e-2, f"mismatch vs reference: {err}"

    print("KERNEL_OK")
</pallas_src>

<mosaic_0001>
module attributes {stable_mosaic.version = 11 : i64} {
  func.func @_conv_stats_kernel(%arg0: i32, %arg1: memref<208x48xbf16, #tpu.memory_space<vmem>>, %arg2: memref<48x128xbf16, #tpu.memory_space<vmem>>, %arg3: memref<208x128xbf16, #tpu.memory_space<vmem>>, %arg4: memref<8x128xf32, #tpu.memory_space<vmem>>, %arg5: memref<8x128xf32, #tpu.memory_space<vmem>>) attributes {dimension_semantics = [#tpu.dimension_semantics<parallel>], iteration_bounds = array<i64: 2>, scalar_prefetch = 0 : i64, scratch_operands = 0 : i64, tpu.core_type = #tpu.core_type<tc>, window_params = [{transform_indices = @transform_0, window_bounds = array<i64: 208, 48>}, {pipeline_mode = #tpu.pipeline_mode<synchronous>, transform_indices = @transform_1, window_bounds = array<i64: 48, 128>}, {transform_indices = @transform_2, window_bounds = array<i64: 208, 128>}, {transform_indices = @transform_3, window_bounds = array<i64: 8, 128>}, {transform_indices = @transform_4, window_bounds = array<i64: 8, 128>}]} {
    %c0 = arith.constant 0 : index
    %c0_0 = arith.constant 0 : index
    %0 = vector.load %arg1[%c0, %c0_0] : memref<208x48xbf16, #tpu.memory_space<vmem>>, vector<208x48xbf16>
    %c0_1 = arith.constant 0 : index
    %c0_2 = arith.constant 0 : index
    %1 = vector.load %arg2[%c0_1, %c0_2] : memref<48x128xbf16, #tpu.memory_space<vmem>>, vector<48x128xbf16>
    %cst = arith.constant dense<0.000000e+00> : vector<208x128xf32>
    %2 = tpu.matmul %0, %1, %cst {dimension_numbers = #tpu.dot_dimension_numbers<[1], [0], [0], [1], [0, 0, 1, 1], [], []>} : vector<208x48xbf16>, vector<48x128xbf16>, vector<208x128xf32> -> vector<208x128xf32>
    %3 = arith.truncf %2 : vector<208x128xf32> to vector<208x128xbf16>
    %c0_3 = arith.constant 0 : index
    %c0_4 = arith.constant 0 : index
    %4 = vector.load %arg3[%c0_3, %c0_4] : memref<208x128xbf16, #tpu.memory_space<vmem>>, vector<208x128xbf16>
    tpu.vector_store %arg3[%c0_3, %c0_4], %3 {strides = array<i32>} : memref<208x128xbf16, #tpu.memory_space<vmem>>, vector<208x128xbf16>,
    %5 = vector.shape_cast %2 : vector<208x128xf32> to vector<26x8x128xf32>
    %cst_5 = arith.constant dense<0.000000e+00> : vector<8x128xf32>
    %6 = vector.multi_reduction <add>, %5, %cst_5 [0] : vector<26x8x128xf32> to vector<8x128xf32>
    %c0_6 = arith.constant 0 : index
    %c0_7 = arith.constant 0 : index
    %7 = vector.load %arg4[%c0_6, %c0_7] : memref<8x128xf32, #tpu.memory_space<vmem>>, vector<8x128xf32>
    tpu.vector_store %arg4[%c0_6, %c0_7], %6 {strides = array<i32>} : memref<8x128xf32, #tpu.memory_space<vmem>>, vector<8x128xf32>,
    %8 = arith.mulf %5, %5 : vector<26x8x128xf32>
    %cst_8 = arith.constant dense<0.000000e+00> : vector<8x128xf32>
    %9 = vector.multi_reduction <add>, %8, %cst_8 [0] : vector<26x8x128xf32> to vector<8x128xf32>
    %c0_9 = arith.constant 0 : index
    %c0_10 = arith.constant 0 : index
    %10 = vector.load %arg5[%c0_9, %c0_10] : memref<8x128xf32, #tpu.memory_space<vmem>>, vector<8x128xf32>
    tpu.vector_store %arg5[%c0_9, %c0_10], %9 {strides = array<i32>} : memref<8x128xf32, #tpu.memory_space<vmem>>, vector<8x128xf32>,
    return
  }
  func.func @transform_0(%arg0: i32) -> (i32, i32) {
    %c0_i32 = arith.constant 0 : i32
    %c0_i32_0 = arith.constant 0 : i32
    return %arg0, %c0_i32 : i32, i32
  }
  func.func @transform_1(%arg0: i32) -> (i32, i32) {
    %c0_i32 = arith.constant 0 : i32
    %c0_i32_0 = arith.constant 0 : i32
    %c0_i32_1 = arith.constant 0 : i32
    return %c0_i32, %c0_i32_0 : i32, i32
  }
  func.func @transform_2(%arg0: i32) -> (i32, i32) {
    %c0_i32 = arith.constant 0 : i32
    %c0_i32_0 = arith.constant 0 : i32
    return %arg0, %c0_i32 : i32, i32
  }
  func.func @transform_3(%arg0: i32) -> (i32, i32) {
    %c0_i32 = arith.constant 0 : i32
    %c0_i32_0 = arith.constant 0 : i32
    return %arg0, %c0_i32 : i32, i32
  }
  func.func @transform_4(%arg0: i32) -> (i32, i32) {
    %c0_i32 = arith.constant 0 : i32
    %c0_i32_0 = arith.constant 0 : i32
    return %arg0, %c0_i32 : i32, i32
  }
}

</mosaic_0001>

<llo_original>
// kernel: tpu_custom_call.1
$region0: #{tpu_custom_call.1}
  #allocation0 [shape = 'u32[]', space=smem, size = 0x4, offset = 0x4, fixed_abs, tag = 'smem constant byte address 0x4 - core index']
  #allocation1 [shape = 'u32[144,128]{1,0:T(1,128)}', space=vmem, size = 0x12000, scoped, tag = 'internal scratch']
  %s0 = inlined_call_operand.vmem [shape: bf16[416,48], index: 0, kind: input, shape index: {}]
  %s1 = inlined_call_operand.vmem [shape: bf16[48,128], index: 1, kind: input, shape index: {}]
  %s2 = inlined_call_operand.hbm [shape: bf16[416,128], index: 2, kind: output, shape index: {0}]
  %s3 = inlined_call_operand.hbm [shape: f32[16,128], index: 3, kind: output, shape index: {1}]
  %s4 = inlined_call_operand.hbm [shape: f32[16,128], index: 4, kind: output, shape index: {2}]
  %5 = xla_tuple %s2, %s3, %s4
  %s6 = sld [smem:[#allocation0]]
  $region57: #{tpu_custom_call.1} parent=0
    _
  %s8 = ssub.s32 1, %s6
  %s9 = scalar_select 0, %s8, %s6
  $region1: #{tpu_custom_call.1} parent=0
    #allocation2 [shape = 'u8[106496]{0}', space=vmem, size = 0x1a000, scoped, tag = 'output window, operand 0']
    #allocation3 [shape = 's32[2]{0}', space=sflag, size = 0x8, scoped, tag = 'scoped memory for tpu_custom_call.1']
    #allocation4 [shape = 'u8[8192]{0}', space=vmem, size = 0x2000, scoped, tag = 'output window, operand 1']
    #allocation5 [shape = 's32[2]{0}', space=sflag, size = 0x8, scoped, tag = 'scoped memory for tpu_custom_call.1']
    #allocation6 [shape = 'u8[8192]{0}', space=vmem, size = 0x2000, scoped, tag = 'output window, operand 2']
    %10 = vsyncpa [#allocation3], 0
    %s11 = scalar_lea.sflag [#allocation3], 1
    %12 = vsyncpa %s11, 0
    %13 = vsyncpa [#allocation5], 0
    %s14 = scalar_lea.sflag [#allocation5], 1
    %15 = vsyncpa %s14, 0
    loop: start=0, step=1, limit=4
    $region2: #{tpu_custom_call.1} parent=1 // loop_pre_header
      _
    $region3: #{tpu_custom_call.1} parent=1 // loop_header
      %s17 = sphi 0, %s21
      %p18 = scmp.ge.s32.totalorder %s17, 4
      %s27 = sphi 0, %s29
      %s30 = sphi 0, %s27
      %s31 = sphi 0, %s30
      %s47 = sphi 0, %s31
      %s51 = sphi 0, %s51
      %s53 = sphi 0, %s51
      %s54 = sphi 0, %s53
      %s68 = sphi 0, %s54
      %s74 = sphi 0, %s76
      %s77 = sphi 0, %s74
      %s78 = sphi 0, %s77
      %s94 = sphi 0, %s78
      %s100 = sphi 0, %s102
      %s103 = sphi 0, %s100
      %s104 = sphi 0, %s103
      %s120 = sphi 0, %s104
      %s126 = sphi 0, %s128
      %s129 = sphi 0, %s126
      %s130 = sphi 0, %s129
      %s146 = sphi 0, %s130
    $region4: #{tpu_custom_call.1} parent=1 // loop_header_branch
      %20 = sbr.rel (%p18) target = $region8
    $region5: #{tpu_custom_call.1} parent=1 // loop_body
      %s22 = ssub.s32 %s17, 1
      %s23 = ssub.s32 %s17, 2
      %s24 = sadd.s32 %s17, 1
      %s25 = ssub.s32 %s17, %s24
      %p26 = scmp.eq.s32.totalorder %s25, 0
      %s28 = sadd.s32 %s27, 1
      %s29 = scalar_select %p26, %s27, %s28
      %p32 = pneg %p26
      %p33 = scmp.eq.s32.totalorder %s17, 1
      %p34 = por %p32, %p33
      %p35 = scmp.ne.s32.totalorder %s27, %s30
      %p36 = scmp.eq.s32.totalorder %s17, 0
      %p37 = por %p35, %p36
      %p38 = scmp.ne.s32.totalorder %s27, %s30
      %p39 = scmp.eq.s32.totalorder %s22, 1
      %p40 = por %p38, %p39
      %p41 = scmp.ne.s32.totalorder %s30, %s31
      %p42 = scmp.eq.s32.totalorder %s22, 0
      %p43 = por %p41, %p42
      %p44 = scmp.ne.s32.totalorder %s30, %s31
      %p45 = scmp.eq.s32.totalorder %s23, 1
      %p46 = por %p44, %p45
      %p48 = scmp.ne.s32.totalorder %s31, %s47
      %p49 = scmp.eq.s32.totalorder %s23, 0
      %p50 = por %p48, %p49
      %s52 = sadd.s32 %s51, 1
      %p55 = scmp.eq.s32.totalorder %s17, 1
      %p56 = scmp.ne.s32.totalorder %s51, %s53
      %p57 = scmp.eq.s32.totalorder %s17, 0
      %p58 = por %p56, %p57
      %p59 = scmp.ne.s32.totalorder %s51, %s53
      %p60 = scmp.eq.s32.totalorder %s22, 1
      %p61 = por %p59, %p60
      %p62 = scmp.ne.s32.totalorder %s53, %s54
      %p63 = scmp.eq.s32.totalorder %s22, 0
      %p64 = por %p62, %p63
      %p65 = scmp.ne.s32.totalorder %s53, %s54
      %p66 = scmp.eq.s32.totalorder %s23, 1
      %p67 = por %p65, %p66
      %p69 = scmp.ne.s32.totalorder %s54, %s68
      %p70 = scmp.eq.s32.totalorder %s23, 0
      %p71 = por %p69, %p70
      %s72 = ssub.s32 %s17, %s24
      %p73 = scmp.eq.s32.totalorder %s72, 0
      %s75 = sadd.s32 %s74, 1
      %s76 = scalar_select %p73, %s74, %s75
      %p79 = pneg %p73
      %p80 = scmp.eq.s32.totalorder %s17, 1
      %p81 = por %p79, %p80
      %p82 = scmp.ne.s32.totalorder %s74, %s77
      %p83 = scmp.eq.s32.totalorder %s17, 0
      %p84 = por %p82, %p83
      %p85 = scmp.ne.s32.totalorder %s74, %s77
      %p86 = scmp.eq.s32.totalorder %s22, 1
      %p87 = por %p85, %p86
      %p88 = scmp.ne.s32.totalorder %s77, %s78
      %p89 = scmp.eq.s32.totalorder %s22, 0
      %p90 = por %p88, %p89
      %p91 = scmp.ne.s32.totalorder %s77, %s78
      %p92 = scmp.eq.s32.totalorder %s23, 1
      %p93 = por %p91, %p92
      %p95 = scmp.ne.s32.totalorder %s78, %s94
      %p96 = scmp.eq.s32.totalorder %s23, 0
      %p97 = por %p95, %p96
      %s98 = ssub.s32 %s17, %s24
      %p99 = scmp.eq.s32.totalorder %s98, 0
      %s101 = sadd.s32 %s100, 1
      %s102 = scalar_select %p99, %s100, %s101
      %p105 = pneg %p99
      %p106 = scmp.eq.s32.totalorder %s17, 1
      %p107 = por %p105, %p106
      %p108 = scmp.ne.s32.totalorder %s100, %s103
      %p109 = scmp.eq.s32.totalorder %s17, 0
      %p110 = por %p108, %p109
      %p111 = scmp.ne.s32.totalorder %s100, %s103
      %p112 = scmp.eq.s32.totalorder %s22, 1
      %p113 = por %p111, %p112
      %p114 = scmp.ne.s32.totalorder %s103, %s104
      %p115 = scmp.eq.s32.totalorder %s22, 0
      %p116 = por %p114, %p115
      %p117 = scmp.ne.s32.totalorder %s103, %s104
      %p118 = scmp.eq.s32.totalorder %s23, 1
      %p119 = por %p117, %p118
      %p121 = scmp.ne.s32.totalorder %s104, %s120
      %p122 = scmp.eq.s32.totalorder %s23, 0
      %p123 = por %p121, %p122
      %s124 = ssub.s32 %s17, %s24
      %p125 = scmp.eq.s32.totalorder %s124, 0
      %s127 = sadd.s32 %s126, 1
      %s128 = scalar_select %p125, %s126, %s127
      %p131 = pneg %p125
      %p132 = scmp.eq.s32.totalorder %s17, 1
      %p133 = por %p131, %p132
      %p134 = scmp.ne.s32.totalorder %s126, %s129
      %p135 = scmp.eq.s32.totalorder %s17, 0
      %p136 = por %p134, %p135
      %p137 = scmp.ne.s32.totalorder %s126, %s129
      %p138 = scmp.eq.s32.totalorder %s22, 1
      %p139 = por %p137, %p138
      %p140 = scmp.ne.s32.totalorder %s129, %s130
      %p141 = scmp.eq.s32.totalorder %s22, 0
      %p142 = por %p140, %p141
      %p143 = scmp.ne.s32.totalorder %s129, %s130
      %p144 = scmp.eq.s32.totalorder %s23, 1
      %p145 = por %p143, %p144
      %p147 = scmp.ne.s32.totalorder %s130, %s146
      %p148 = scmp.eq.s32.totalorder %s23, 0
      %p149 = por %p147, %p148
      %p150 = scmp.le.s32.totalorder 1, %s17
      %p151 = scmp.lt.s32.totalorder %s17, 3
      %p152 = pnand %p150, %p151
      %p153 = pneg %p152
      // Predicated region
      $region9: #{tpu_custom_call.1} parent=5 // pred_check
        _
      $region10: #{tpu_custom_call.1} parent=5 // pred_check_branch
        %155 = sbr.rel (%p152) target = $region12
      $region11: #{tpu_custom_call.1} parent=5 // pred_region
        %s156 = ssub.s32 %s17, 1
        // Predicated region
        $region13: #{tpu_custom_call.1} parent=11 // pred_check
          %p157 = pneg %p64
        $region14: #{tpu_custom_call.1} parent=11 // pred_check_branch
          %159 = sbr.rel (%p157) target = $region16
        $region15: #{tpu_custom_call.1} parent=11 // pred_region
          _
        $region16: #{tpu_custom_call.1} parent=11 // pred_fallthru
          _
      $region12: #{tpu_custom_call.1} parent=5 // pred_fallthru
        _
      %p160 = scmp.lt.s32.totalorder %s17, 2
      // Predicated region
      $region17: #{tpu_custom_call.1} parent=5 // pred_check
        %p161 = pneg %p160
      $region18: #{tpu_custom_call.1} parent=5 // pred_check_branch
        %163 = sbr.rel (%p161) target = $region20
      $region19: #{tpu_custom_call.1} parent=5 // pred_region
        // Predicated region
        $region21: #{tpu_custom_call.1} parent=19 // pred_check
          %p164 = pneg %p37
        $region22: #{tpu_custom_call.1} parent=19 // pred_check_branch
          %166 = sbr.rel (%p164) target = $region24
        $region23: #{tpu_custom_call.1} parent=19 // pred_region
          %s167 = smul.u32 26, %s17
          %p168 = scmp.lt.s32.totalorder %s167, 51
          %s169 = scalar_select %p168, %s167, 51
          %s170 = smul.addr %s169, 4
          %s171 = scalar_lea.vmem %s0, %s170
          %s172 = smul.u32 26, %s17
        $region24: #{tpu_custom_call.1} parent=19 // pred_fallthru
          _
      $region20: #{tpu_custom_call.1} parent=5 // pred_fallthru
        _
      %p173 = scmp.le.s32.totalorder 1, %s17
      %p174 = scmp.lt.s32.totalorder %s17, 3
      %p175 = pnand %p173, %p174
      %p176 = pneg %p175
      // Predicated region
      $region25: #{tpu_custom_call.1} parent=5 // pred_check
        _
      $region26: #{tpu_custom_call.1} parent=5 // pred_check_branch
        %178 = sbr.rel (%p175) target = $region28
      $region27: #{tpu_custom_call.1} parent=5 // pred_region
        %s179 = ssub.s32 %s17, 1
        %s180 = smul.u32 26, %s22
        %p181 = scmp.lt.s32.totalorder %s180, 51
        %s182 = scalar_select %p181, %s180, 51
        %s183 = smul.addr %s182, 4
        %s184 = scalar_lea.vmem %s0, %s183
        %p185 = pneg %p43
        %p186 = pneg %p40
        %p187 = pneg %p64
        %p188 = pneg %p61
        %p189 = pneg %p90
        %p190 = pneg %p87
        %s191 = sand.u32 %s77, 1
        %s192 = scalar_lea.sflag [#allocation3], %s191
        %s193 = sand.u32 %s77, 1
        %s194 = smul.addr %s193, 104
        %s195 = scalar_lea.vmem [#allocation2], %s194
        %p196 = pneg %p116
        %p197 = pneg %p113
        %s198 = sand.u32 %s22, 1
        %s199 = scalar_lea.sflag [#allocation5], %s198
        %s200 = sand.u32 %s103, 1
        %s201 = smul.addr %s200, 8
        %s202 = scalar_lea.vmem [#allocation4], %s201
        %p203 = pneg %p142
        %p204 = pneg %p139
        %s205 = sand.u32 %s22, 1
        %s206 = scalar_lea.sflag [#allocation5], %s205
        %s207 = sand.u32 %s129, 1
        %s208 = smul.addr %s207, 8
        %s209 = scalar_lea.vmem [#allocation6], %s208
        %s210 = smul.u32 26, %s22
        %p211 = scmp.lt.s32.totalorder %s210, 51
        %s212 = scalar_select %p211, %s210, 51
        %s213 = smul.addr %s212, 4
        %s214 = scalar_lea.vmem %s0, %s213
        %s215 = smul.u32 26, %s22
        %s216 = smul.u32 26, %s22
        %v218 = vld [vmem:[%s214] sm:$0xf]
        %v219 = vld [vmem:[%s214 + $0x4] sm:$0xf]
        %v220 = vld [vmem:[%s214 + $0x8] sm:$0xf]
        %v221 = vld [vmem:[%s214 + $0xc] sm:$0xf]
        %v222 = vld [vmem:[%s214 + $0x10] sm:$0xf]
        %v223 = vld [vmem:[%s214 + $0x14] sm:$0xf]
        %v224 = vld [vmem:[%s214 + $0x18] sm:$0xf]
        %v225 = vld [vmem:[%s214 + $0x1c] sm:$0xf]
        %v226 = vld [vmem:[%s214 + $0x20] sm:$0xf]
        %v227 = vld [vmem:[%s214 + $0x24] sm:$0xf]
        %v228 = vld [vmem:[%s214 + $0x28] sm:$0xf]
        %v229 = vld [vmem:[%s214 + $0x2c] sm:$0xf]
        %v230 = vld [vmem:[%s214 + $0x30] sm:$0xf]
        %v231 = vld [vmem:[%s214 + $0x34] sm:$0xf]
        %v232 = vld [vmem:[%s214 + $0x38] sm:$0xf]
        %v233 = vld [vmem:[%s214 + $0x3c] sm:$0xf]
        %v234 = vld [vmem:[%s214 + $0x40] sm:$0xf]
        %v235 = vld [vmem:[%s214 + $0x44] sm:$0xf]
        %v236 = vld [vmem:[%s214 + $0x48] sm:$0xf]
        %v237 = vld [vmem:[%s214 + $0x4c] sm:$0xf]
        %v238 = vld [vmem:[%s214 + $0x50] sm:$0xf]
        %v239 = vld [vmem:[%s214 + $0x54] sm:$0xf]
        %v240 = vld [vmem:[%s214 + $0x58] sm:$0xf]
        %v241 = vld [vmem:[%s214 + $0x5c] sm:$0xf]
        %v242 = vld [vmem:[%s214 + $0x60] sm:$0xf]
        %v243 = vld [vmem:[%s214 + $0x64] sm:$0xf]
        %v244 = vld [vmem:[%s1] sm:$0xf]
        %v245 = vld [vmem:[%s1 + $0x4] sm:$0xf]
        %v246 = vld [vmem:[%s1 + $0x8] sm:$0xf]
        %v247 = vld [vmem:[%s1 + $0xc] sm:$0xf]
        %v248 = vld [vmem:[%s1 + $0x10] sm:$0xf]
        %v249 = vld [vmem:[%s1 + $0x14] sm:$0xf]
        %v276 = vunpack.c.l.b16 %v218
        %v277 = vunpack.c.l.b16 %v219
        %v278 = vunpack.c.l.b16 %v220
        %v279 = vunpack.c.l.b16 %v221
        %v280 = vunpack.c.l.b16 %v222
        %v281 = vunpack.c.l.b16 %v223
        %v282 = vunpack.c.l.b16 %v224
        %v283 = vunpack.c.l.b16 %v225
        %v284 = vunpack.c.l.b16 %v226
        %v285 = vunpack.c.l.b16 %v227
        %v286 = vunpack.c.l.b16 %v228
        %v287 = vunpack.c.l.b16 %v229
        %v288 = vunpack.c.l.b16 %v230
        %v289 = vunpack.c.l.b16 %v231
        %v290 = vunpack.c.l.b16 %v232
        %v291 = vunpack.c.l.b16 %v233
        %v292 = vunpack.c.l.b16 %v234
        %v293 = vunpack.c.l.b16 %v235
        %v294 = vunpack.c.l.b16 %v236
        %v295 = vunpack.c.l.b16 %v237
        %v296 = vunpack.c.l.b16 %v238
        %v297 = vunpack.c.l.b16 %v239
        %v298 = vunpack.c.l.b16 %v240
        %v299 = vunpack.c.l.b16 %v241
        %v300 = vunpack.c.l.b16 %v242
        %v301 = vunpack.c.l.b16 %v243
        %v302 = vpack.c.b16 %v277, %v276
        %v303 = vpack.c.b16 %v279, %v278
        %v304 = vpack.c.b16 %v281, %v280
        %v305 = vpack.c.b16 %v283, %v282
        %v306 = vpack.c.b16 %v285, %v284
        %v307 = vpack.c.b16 %v287, %v286
        %v308 = vpack.c.b16 %v289, %v288
        %v309 = vpack.c.b16 %v291, %v290
        %v310 = vpack.c.b16 %v293, %v292
        %v311 = vpack.c.b16 %v295, %v294
        %v312 = vpack.c.b16 %v297, %v296
        %v313 = vpack.c.b16 %v299, %v298
        %v314 = vpack.c.b16 %v301, %v300
        %v321 = vunpack.c.l.b16 %v244
        %v322 = vunpack.c.l.b16 %v245
        %v323 = vunpack.c.l.b16 %v246
        %v324 = vunpack.c.l.b16 %v247
        %v325 = vunpack.c.l.b16 %v248
        %v326 = vunpack.c.l.b16 %v249
        %v327 = vpack.c.b16 %v322, %v321
        %v328 = vpack.c.b16 %v324, %v323
        %v329 = vpack.c.b16 %v326, %v325
        %vm333 = vcmask 392192
        %v335 = vsel %vm333, %v302, 0
        %v338 = vsel %vm333, %v303, 0
        %v341 = vsel %vm333, %v304, 0
        %v344 = vsel %vm333, %v305, 0
        %v347 = vsel %vm333, %v306, 0
        %v350 = vsel %vm333, %v307, 0
        %v353 = vsel %vm333, %v308, 0
        %v356 = vsel %vm333, %v309, 0
        %v359 = vsel %vm333, %v310, 0
        %v362 = vsel %vm333, %v311, 0
        %v365 = vsel %vm333, %v312, 0
        %v368 = vsel %vm333, %v313, 0
        %v371 = vsel %vm333, %v314, 0
        %373 = vmatprep.subr.bf16.mxu0 0
        %374 = vmatpush1.bf16.msra.mxu0 %v327
        %375 = vmatprep.subr.bf16.mxu0 0
        %376 = vmatpush1.bf16.msra.mxu0 %v328
        %377 = vmatprep.subr.bf16.mxu0 0
        %378 = vmatpush1.bf16.msra.mxu0 %v329
        %379 = vmatprep.subr.bf16.mxu0 0
        %380 = vmatpush1.bf16.msra.mxu0 0
        %381 = vmatprep.subr.bf16.mxu0 0
        %382 = vmatpush1.bf16.msra.mxu0 0
        %383 = vmatprep.subr.bf16.mxu0 0
        %384 = vmatpush1.bf16.msra.mxu0 0
        %385 = vmatprep.subr.bf16.mxu0 0
        %386 = vmatpush1.bf16.msra.mxu0 0
        %387 = vmatprep.subr.bf16.mxu0 0
        %388 = vmatpush1.bf16.msra.mxu0 0
        %389 = vmatprep.subr.bf16.mxu0 0
        %390 = vmatpush1.bf16.msra.mxu0 0
        %391 = vmatprep.subr.bf16.mxu0 0
        %392 = vmatpush1.bf16.msra.mxu0 0
        %393 = vmatprep.subr.bf16.mxu0 0
        %394 = vmatpush1.bf16.msra.mxu0 0
        %395 = vmatprep.subr.bf16.mxu0 0
        %396 = vmatpush1.bf16.msra.mxu0 0
        %397 = vmatprep.subr.bf16.mxu0 0
        %398 = vmatpush1.bf16.msra.mxu0 0
        %399 = vmatprep.subr.bf16.mxu0 0
        %400 = vmatpush1.bf16.msra.mxu0 0
        %401 = vmatprep.subr.bf16.mxu0 0
        %402 = vmatpush1.bf16.msra.mxu0 0
        %403 = vmatprep.subr.bf16.mxu0 0
        %404 = vmatpush1.bf16.msra.mxu0 0
        %405 = vmatprep.mubr.bf16.mxu0 0
        %406 = vmatmul.mubr.bf16.gmra.mrb[0].mxu0 %v335
        %v407 = vpop.f32.mrb[0].mxu0
        %v408 = vadd.f32 0.0, %v407
        %v409 = vpop.f32.mrb[0].mxu0
        %v410 = vpop.f32.mrb[0].mxu0
        %v411 = vadd.f32 0.0, %v410
        %v412 = vpop.f32.mrb[0].mxu0
        %413 = vmatprep.mubr.bf16.mxu0 0
        %414 = vmatmul.mubr.bf16.gmra.mrb[0].mxu0 %v338
        %v415 = vpop.f32.mrb[0].mxu0
        %v416 = vadd.f32 0.0, %v415
        %v417 = vpop.f32.mrb[0].mxu0
        %v418 = vpop.f32.mrb[0].mxu0
        %v419 = vadd.f32 0.0, %v418
        %v420 = vpop.f32.mrb[0].mxu0
        %421 = vmatprep.mubr.bf16.mxu0 0
        %422 = vmatmul.mubr.bf16.gmra.mrb[0].mxu0 %v341
        %v423 = vpop.f32.mrb[0].mxu0
        %v424 = vadd.f32 0.0, %v423
        %v425 = vpop.f32.mrb[0].mxu0
        %v426 = vpop.f32.mrb[0].mxu0
        %v427 = vadd.f32 0.0, %v426
        %v428 = vpop.f32.mrb[0].mxu0
        %429 = vmatprep.mubr.bf16.mxu0 0
        %430 = vmatmul.mubr.bf16.gmra.mrb[0].mxu0 %v344
        %v431 = vpop.f32.mrb[0].mxu0
        %v432 = vadd.f32 0.0, %v431
        %v433 = vpop.f32.mrb[0].mxu0
        %v434 = vpop.f32.mrb[0].mxu0
        %v435 = vadd.f32 0.0, %v434
        %v436 = vpop.f32.mrb[0].mxu0
        %437 = vmatprep.mubr.bf16.mxu0 0
        %438 = vmatmul.mubr.bf16.gmra.mrb[0].mxu0 %v347
        %v439 = vpop.f32.mrb[0].mxu0
        %v440 = vadd.f32 0.0, %v439
        %v441 = vpop.f32.mrb[0].mxu0
        %v442 = vpop.f32.mrb[0].mxu0
        %v443 = vadd.f32 0.0, %v442
        %v444 = vpop.f32.mrb[0].mxu0
        %445 = vmatprep.mubr.bf16.mxu0 0
        %446 = vmatmul.mubr.bf16.gmra.mrb[0].mxu0 %v350
        %v447 = vpop.f32.mrb[0].mxu0
        %v448 = vadd.f32 0.0, %v447
        %v449 = vpop.f32.mrb[0].mxu0
        %v450 = vpop.f32.mrb[0].mxu0
        %v451 = vadd.f32 0.0, %v450
        %v452 = vpop.f32.mrb[0].mxu0
        %453 = vmatprep.mubr.bf16.mxu0 0
        %454 = vmatmul.mubr.bf16.gmra.mrb[0].mxu0 %v353
        %v455 = vpop.f32.mrb[0].mxu0
        %v456 = vadd.f32 0.0, %v455
        %v457 = vpop.f32.mrb[0].mxu0
        %v458 = vpop.f32.mrb[0].mxu0
        %v459 = vadd.f32 0.0, %v458
        %v460 = vpop.f32.mrb[0].mxu0
        %461 = vmatprep.mubr.bf16.mxu0 0
        %462 = vmatmul.mubr.bf16.gmra.mrb[0].mxu0 %v356
        %v463 = vpop.f32.mrb[0].mxu0
        %v464 = vadd.f32 0.0, %v463
        %v465 = vpop.f32.mrb[0].mxu0
        %v466 = vpop.f32.mrb[0].mxu0
        %v467 = vadd.f32 0.0, %v466
        %v468 = vpop.f32.mrb[0].mxu0
        %469 = vmatprep.mubr.bf16.mxu0 0
        %470 = vmatmul.mubr.bf16.gmra.mrb[0].mxu0 %v359
        %v471 = vpop.f32.mrb[0].mxu0
        %v472 = vadd.f32 0.0, %v471
        %v473 = vpop.f32.mrb[0].mxu0
        %v474 = vpop.f32.mrb[0].mxu0
        %v475 = vadd.f32 0.0, %v474
        %v476 = vpop.f32.mrb[0].mxu0
        %477 = vmatprep.mubr.bf16.mxu0 0
        %478 = vmatmul.mubr.bf16.gmra.mrb[0].mxu0 %v362
        %v479 = vpop.f32.mrb[0].mxu0
        %v480 = vadd.f32 0.0, %v479
        %v481 = vpop.f32.mrb[0].mxu0
        %v482 = vpop.f32.mrb[0].mxu0
        %v483 = vadd.f32 0.0, %v482
        %v484 = vpop.f32.mrb[0].mxu0
        %485 = vmatprep.mubr.bf16.mxu0 0
        %486 = vmatmul.mubr.bf16.gmra.mrb[0].mxu0 %v365
        %v487 = vpop.f32.mrb[0].mxu0
        %v488 = vadd.f32 0.0, %v487
        %v489 = vpop.f32.mrb[0].mxu0
        %v490 = vpop.f32.mrb[0].mxu0
        %v491 = vadd.f32 0.0, %v490
        %v492 = vpop.f32.mrb[0].mxu0
        %493 = vmatprep.mubr.bf16.mxu0 0
        %494 = vmatmul.mubr.bf16.gmra.mrb[0].mxu0 %v368
        %v495 = vpop.f32.mrb[0].mxu0
        %v496 = vadd.f32 0.0, %v495
        %v497 = vpop.f32.mrb[0].mxu0
        %v498 = vpop.f32.mrb[0].mxu0
        %v499 = vadd.f32 0.0, %v498
        %v500 = vpop.f32.mrb[0].mxu0
        %501 = vmatprep.mubr.bf16.mxu0 0
        %502 = vmatmul.mubr.bf16.gmra.mrb[0].mxu0 %v371
        %v503 = vpop.f32.mrb[0].mxu0
        %v504 = vadd.f32 0.0, %v503
        %v505 = vpop.f32.mrb[0].mxu0
        %v506 = vpop.f32.mrb[0].mxu0
        %v507 = vadd.f32 0.0, %v506
        %v508 = vpop.f32.mrb[0].mxu0
        %509 = vdwg.mxu0
        %v510 = vpack.c.bf16 %v411, %v408
        %v511 = vpack.c.bf16 %v419, %v416
        %v512 = vpack.c.bf16 %v427, %v424
        %v513 = vpack.c.bf16 %v435, %v432
        %v514 = vpack.c.bf16 %v443, %v440
        %v515 = vpack.c.bf16 %v451, %v448
        %v516 = vpack.c.bf16 %v459, %v456
        %v517 = vpack.c.bf16 %v467, %v464
        %v518 = vpack.c.bf16 %v475, %v472
        %v519 = vpack.c.bf16 %v483, %v480
        %v520 = vpack.c.bf16 %v491, %v488
        %v521 = vpack.c.bf16 %v499, %v496
        %v522 = vpack.c.bf16 %v507, %v504
        %v536 = vunpack.c.l.b16 %v510
        %v537 = vunpack.c.h.b16 %v510
        %v538 = vunpack.c.l.b16 %v511
        %v539 = vunpack.c.h.b16 %v511
        %v540 = vunpack.c.l.b16 %v512
        %v541 = vunpack.c.h.b16 %v512
        %v542 = vunpack.c.l.b16 %v513
        %v543 = vunpack.c.h.b16 %v513
        %v544 = vunpack.c.l.b16 %v514
        %v545 = vunpack.c.h.b16 %v514
        %v546 = vunpack.c.l.b16 %v515
        %v547 = vunpack.c.h.b16 %v515
        %v548 = vunpack.c.l.b16 %v516
        %v549 = vunpack.c.h.b16 %v516
        %v550 = vunpack.c.l.b16 %v517
        %v551 = vunpack.c.h.b16 %v517
        %v552 = vunpack.c.l.b16 %v518
        %v553 = vunpack.c.h.b16 %v518
        %v554 = vunpack.c.l.b16 %v519
        %v555 = vunpack.c.h.b16 %v519
        %v556 = vunpack.c.l.b16 %v520
        %v557 = vunpack.c.h.b16 %v520
        %v558 = vunpack.c.l.b16 %v521
        %v559 = vunpack.c.h.b16 %v521
        %v560 = vunpack.c.l.b16 %v522
        %v561 = vunpack.c.h.b16 %v522
        %v562 = vpack.c.b16 %v536, %v536
        %v563 = vpack.c.b16 %v537, %v537
        %v564 = vpack.c.b16 %v538, %v538
        %v565 = vpack.c.b16 %v539, %v539
        %v566 = vpack.c.b16 %v540, %v540
        %v567 = vpack.c.b16 %v541, %v541
        %v568 = vpack.c.b16 %v542, %v542
        %v569 = vpack.c.b16 %v543, %v543
        %v570 = vpack.c.b16 %v544, %v544
        %v571 = vpack.c.b16 %v545, %v545
        %v572 = vpack.c.b16 %v546, %v546
        %v573 = vpack.c.b16 %v547, %v547
        %v574 = vpack.c.b16 %v548, %v548
        %v575 = vpack.c.b16 %v549, %v549
        %v576 = vpack.c.b16 %v550, %v550
        %v577 = vpack.c.b16 %v551, %v551
        %v578 = vpack.c.b16 %v552, %v552
        %v579 = vpack.c.b16 %v553, %v553
        %v580 = vpack.c.b16 %v554, %v554
        %v581 = vpack.c.b16 %v555, %v555
        %v582 = vpack.c.b16 %v556, %v556
        %v583 = vpack.c.b16 %v557, %v557
        %v584 = vpack.c.b16 %v558, %v558
        %v585 = vpack.c.b16 %v559, %v559
        %v586 = vpack.c.b16 %v560, %v560
        %v587 = vpack.c.b16 %v561, %v561
        %614 = vst [vmem:[%s195] sm:$0xf] %v562
        %615 = vst [vmem:[%s195 + $0x4] sm:$0xf] %v563
        %616 = vst [vmem:[%s195 + $0x8] sm:$0xf] %v564
        %617 = vst [vmem:[%s195 + $0xc] sm:$0xf] %v565
        %618 = vst [vmem:[%s195 + $0x10] sm:$0xf] %v566
        %619 = vst [vmem:[%s195 + $0x14] sm:$0xf] %v567
        %620 = vst [vmem:[%s195 + $0x18] sm:$0xf] %v568
        %621 = vst [vmem:[%s195 + $0x1c] sm:$0xf] %v569
        %622 = vst [vmem:[%s195 + $0x20] sm:$0xf] %v570
        %623 = vst [vmem:[%s195 + $0x24] sm:$0xf] %v571
        %624 = vst [vmem:[%s195 + $0x28] sm:$0xf] %v572
        %625 = vst [vmem:[%s195 + $0x2c] sm:$0xf] %v573
        %626 = vst [vmem:[%s195 + $0x30] sm:$0xf] %v574
        %627 = vst [vmem:[%s195 + $0x34] sm:$0xf] %v575
        %628 = vst [vmem:[%s195 + $0x38] sm:$0xf] %v576
        %629 = vst [vmem:[%s195 + $0x3c] sm:$0xf] %v577
        %630 = vst [vmem:[%s195 + $0x40] sm:$0xf] %v578
        %631 = vst [vmem:[%s195 + $0x44] sm:$0xf] %v579
        %632 = vst [vmem:[%s195 + $0x48] sm:$0xf] %v580
        %633 = vst [vmem:[%s195 + $0x4c] sm:$0xf] %v581
        %634 = vst [vmem:[%s195 + $0x50] sm:$0xf] %v582
        %635 = vst [vmem:[%s195 + $0x54] sm:$0xf] %v583
        %636 = vst [vmem:[%s195 + $0x58] sm:$0xf] %v584
        %637 = vst [vmem:[%s195 + $0x5c] sm:$0xf] %v585
        %638 = vst [vmem:[%s195 + $0x60] sm:$0xf] %v586
        %639 = vst [vmem:[%s195 + $0x64] sm:$0xf] %v587
        %v640 = vadd.f32 %v408, %v411
        %v641 = vadd.f32 %v640, %v416
        %v642 = vadd.f32 %v641, %v419
        %v643 = vadd.f32 %v642, %v424
        %v644 = vadd.f32 %v643, %v427
        %v645 = vadd.f32 %v644, %v432
        %v646 = vadd.f32 %v645, %v435
        %v647 = vadd.f32 %v646, %v440
        %v648 = vadd.f32 %v647, %v443
        %v649 = vadd.f32 %v648, %v448
        %v650 = vadd.f32 %v649, %v451
        %v651 = vadd.f32 %v650, %v456
        %v652 = vadd.f32 %v651, %v459
        %v653 = vadd.f32 %v652, %v464
        %v654 = vadd.f32 %v653, %v467
        %v655 = vadd.f32 %v654, %v472
        %v656 = vadd.f32 %v655, %v475
        %v657 = vadd.f32 %v656, %v480
        %v658 = vadd.f32 %v657, %v483
        %v659 = vadd.f32 %v658, %v488
        %v660 = vadd.f32 %v659, %v491
        %v661 = vadd.f32 %v660, %v496
        %v662 = vadd.f32 %v661, %v499
        %v663 = vadd.f32 %v662, %v504
        %v664 = vadd.f32 %v663, %v507
        %665 = vst [vmem:[%s202] sm:$0xff] %v664
        %v666 = vmul.f32 %v408, %v408
        %v667 = vmul.f32 %v411, %v411
        %v668 = vmul.f32 %v416, %v416
        %v669 = vmul.f32 %v419, %v419
        %v670 = vmul.f32 %v424, %v424
        %v671 = vmul.f32 %v427, %v427
        %v672 = vmul.f32 %v432, %v432
        %v673 = vmul.f32 %v435, %v435
        %v674 = vmul.f32 %v440, %v440
        %v675 = vmul.f32 %v443, %v443
        %v676 = vmul.f32 %v448, %v448
        %v677 = vmul.f32 %v451, %v451
        %v678 = vmul.f32 %v456, %v456
        %v679 = vmul.f32 %v459, %v459
        %v680 = vmul.f32 %v464, %v464
        %v681 = vmul.f32 %v467, %v467
        %v682 = vmul.f32 %v472, %v472
        %v683 = vmul.f32 %v475, %v475
        %v684 = vmul.f32 %v480, %v480
        %v685 = vmul.f32 %v483, %v483
        %v686 = vmul.f32 %v488, %v488
        %v687 = vmul.f32 %v491, %v491
        %v688 = vmul.f32 %v496, %v496
        %v689 = vmul.f32 %v499, %v499
        %v690 = vmul.f32 %v504, %v504
        %v691 = vmul.f32 %v507, %v507
        %v692 = vadd.f32 %v666, %v667
        %v693 = vadd.f32 %v692, %v668
        %v694 = vadd.f32 %v693, %v669
        %v695 = vadd.f32 %v694, %v670
        %v696 = vadd.f32 %v695, %v671
        %v697 = vadd.f32 %v696, %v672
        %v698 = vadd.f32 %v697, %v673
        %v699 = vadd.f32 %v698, %v674
        %v700 = vadd.f32 %v699, %v675
        %v701 = vadd.f32 %v700, %v676
        %v702 = vadd.f32 %v701, %v677
        %v703 = vadd.f32 %v702, %v678
        %v704 = vadd.f32 %v703, %v679
        %v705 = vadd.f32 %v704, %v680
        %v706 = vadd.f32 %v705, %v681
        %v707 = vadd.f32 %v706, %v682
        %v708 = vadd.f32 %v707, %v683
        %v709 = vadd.f32 %v708, %v684
        %v710 = vadd.f32 %v709, %v685
        %v711 = vadd.f32 %v710, %v686
        %v712 = vadd.f32 %v711, %v687
        %v713 = vadd.f32 %v712, %v688
        %v714 = vadd.f32 %v713, %v689
        %v715 = vadd.f32 %v714, %v690
        %v716 = vadd.f32 %v715, %v691
        %717 = vst [vmem:[%s209] sm:$0xff] %v716
        %s718 = sand.u32 %s77, 1
        %s719 = scalar_lea.sflag [#allocation3], %s718
        %s720 = sand.u32 %s77, 1
        %s721 = smul.addr %s720, 104
        %s722 = scalar_lea.vmem [#allocation2], %s721
        %s723 = sand.u32 %s22, 1
        %s724 = scalar_lea.sflag [#allocation5], %s723
        %s725 = sand.u32 %s103, 1
        %s726 = smul.addr %s725, 8
        %s727 = scalar_lea.vmem [#allocation4], %s726
        %s728 = sand.u32 %s22, 1
        %s729 = scalar_lea.sflag [#allocation5], %s728
        %s730 = sand.u32 %s129, 1
        %s731 = smul.addr %s730, 8
        %s732 = scalar_lea.vmem [#allocation6], %s731
        // Predicated region
        $region29: #{tpu_custom_call.1} parent=27 // pred_check
          %p733 = pneg %p87
        $region30: #{tpu_custom_call.1} parent=27 // pred_check_branch
          %735 = sbr.rel (%p733) target = $region32
        $region31: #{tpu_custom_call.1} parent=27 // pred_region
          %s736 = smul.u32 26, %s22
          %s738 = ssub.s32 1664, 1664
          %739 = vsyncadd %s719, %s738
          %s740 = smul.addr %s736, 64
          %s741 = scalar_lea.hbm %s2, %s740
          %s742 = sshll.u32 %s722, 4
          %s743 = int_to_ptr.vmem [resolvable:$true] %s742
          %748 = dma.vmem_to_hbm [thread:$0]  %s743, 1664, %s741, %s719, 64, 64, 4
        $region32: #{tpu_custom_call.1} parent=27 // pred_fallthru
          _
        // Predicated region
        $region33: #{tpu_custom_call.1} parent=27 // pred_check
          %p749 = pneg %p113
        $region34: #{tpu_custom_call.1} parent=27 // pred_check_branch
          %751 = sbr.rel (%p749) target = $region36
        $region35: #{tpu_custom_call.1} parent=27 // pred_region
          %s753 = ssub.s32 128, 128
          %754 = vsyncadd %s724, %s753
          %s755 = smul.addr %s22, 128
          %s756 = scalar_lea.hbm %s3, %s755
          %s758 = sshll.u32 %s727, 4
          %s759 = int_to_ptr.vmem [resolvable:$true] %s758
          %761 = dma.vmem_to_hbm [thread:$0]  %s759, 128, %s756, %s724
        $region36: #{tpu_custom_call.1} parent=27 // pred_fallthru
          _
        // Predicated region
        $region37: #{tpu_custom_call.1} parent=27 // pred_check
          %p762 = pneg %p139
        $region38: #{tpu_custom_call.1} parent=27 // pred_check_branch
          %764 = sbr.rel (%p762) target = $region40
        $region39: #{tpu_custom_call.1} parent=27 // pred_region
          %s766 = ssub.s32 128, 128
          %767 = vsyncadd %s729, %s766
          %s768 = smul.addr %s22, 128
          %s769 = scalar_lea.hbm %s4, %s768
          %s771 = sshll.u32 %s732, 4
          %s772 = int_to_ptr.vmem [resolvable:$true] %s771
          %774 = dma.vmem_to_hbm [thread:$0]  %s772, 128, %s769, %s729
        $region40: #{tpu_custom_call.1} parent=27 // pred_fallthru
          _
      $region28: #{tpu_custom_call.1} parent=5 // pred_fallthru
        _
      %p775 = scmp.le.s32.totalorder 2, %s17
      // Predicated region
      $region41: #{tpu_custom_call.1} parent=5 // pred_check
        %p776 = pneg %p775
      $region42: #{tpu_custom_call.1} parent=5 // pred_check_branch
        %778 = sbr.rel (%p776) target = $region44
      $region43: #{tpu_custom_call.1} parent=5 // pred_region
        %s779 = ssub.s32 %s17, 2
        // Predicated region
        $region45: #{tpu_custom_call.1} parent=43 // pred_check
          %p780 = pneg %p93
        $region46: #{tpu_custom_call.1} parent=43 // pred_check_branch
          %782 = sbr.rel (%p780) target = $region48
        $region47: #{tpu_custom_call.1} parent=43 // pred_region
          %s783 = sand.u32 %s78, 1
          %s784 = scalar_lea.sflag [#allocation3], %s783
          %s785 = sand.u32 %s78, 1
          %s786 = smul.addr %s785, 104
          %s787 = scalar_lea.vmem [#allocation2], %s786
          %788 = dma.done %s784, 1664
        $region48: #{tpu_custom_call.1} parent=43 // pred_fallthru
          _
        // Predicated region
        $region49: #{tpu_custom_call.1} parent=43 // pred_check
          %p789 = pneg %p119
        $region50: #{tpu_custom_call.1} parent=43 // pred_check_branch
          %791 = sbr.rel (%p789) target = $region52
        $region51: #{tpu_custom_call.1} parent=43 // pred_region
          %s792 = sand.u32 %s23, 1
          %s793 = scalar_lea.sflag [#allocation5], %s792
          %s794 = sand.u32 %s104, 1
          %s795 = smul.addr %s794, 8
          %s796 = scalar_lea.vmem [#allocation4], %s795
          %797 = dma.done %s793, 128
        $region52: #{tpu_custom_call.1} parent=43 // pred_fallthru
          _
        // Predicated region
        $region53: #{tpu_custom_call.1} parent=43 // pred_check
          %p798 = pneg %p145
        $region54: #{tpu_custom_call.1} parent=43 // pred_check_branch
          %800 = sbr.rel (%p798) target = $region56
        $region55: #{tpu_custom_call.1} parent=43 // pred_region
          %s801 = sand.u32 %s23, 1
          %s802 = scalar_lea.sflag [#allocation5], %s801
          %s803 = sand.u32 %s130, 1
          %s804 = smul.addr %s803, 8
          %s805 = scalar_lea.vmem [#allocation6], %s804
          %806 = dma.done %s802, 128
        $region56: #{tpu_custom_call.1} parent=43 // pred_fallthru
          _
      $region44: #{tpu_custom_call.1} parent=5 // pred_fallthru
        _
    $region6: #{tpu_custom_call.1} parent=1 // loop_footer
      %s21 = sadd.s32 1, %s17
    $region7: #{tpu_custom_call.1} parent=1 // loop_footer_branch
      %16 = sbr.rel target = $region3
    $region8: #{tpu_custom_call.1} parent=1 // loop_exit
      _
    %807 = vsyncpa [#allocation3], 1
    %s808 = scalar_lea.sflag [#allocation3], 1
    %809 = vsyncpa %s808, 1
    %810 = vsyncpa [#allocation5], 1
    %s811 = scalar_lea.sflag [#allocation5], 1
    %812 = vsyncpa %s811, 1

</llo_original>
